<compile_context>
chip_gen: v7x
topology: tpu7x:2x2x1
jax: 0.10.0
libtpu: 0.0.40
codegen_flags: <defaults>
</compile_context>

<pallas_src>
import jax
import jax.numpy as jnp
from jax.experimental import pallas as pl
from jax.experimental.pallas import tpu as pltpu

EPS = 1e-6  # matches nn.CosineSimilarity(dim=1, eps=1e-6)


def _round_up(x: int, m: int) -> int:
    return (x + m - 1) // m * m


def _cosine_kernel(ana_ref, gold_ref, cands_ref, out_ref):
    """ana/gold: [TB, D]; cands: [TB, C*D] (flattened); out: [TB, L>=C+1]."""
    tb, D = ana_ref.shape
    C = cands_ref.shape[-1] // D
    L = out_ref.shape[-1]

    ana = ana_ref[...]                                          # [TB, D]
    sumsq_ana = jnp.sum(ana * ana, axis=-1, keepdims=True)      # [TB, 1]

    def col_cos(vec):                                           # vec: [TB, D]
        dot = jnp.sum(ana * vec, axis=-1, keepdims=True)        # [TB, 1]
        ssq = jnp.sum(vec * vec, axis=-1, keepdims=True)        # [TB, 1]
        # cos = x.y / max(||x||*||y||, eps)   (clamp on the *product*)
        denom = jnp.maximum(jnp.sqrt(sumsq_ana * ssq), EPS)
        return dot * pl.reciprocal(denom, approx=True)          # EUP slot

    # column 0 = gold, columns 1..C = candidates (no [TB, C, D] temporary)
    cols = [col_cos(gold_ref[...])]
    for c in range(C):
        cols.append(col_cos(cands_ref[:, c * D:(c + 1) * D]))

    n_pad = L - (C + 1)
    if n_pad > 0:
        cols.append(jnp.zeros((tb, n_pad), jnp.float32))
    out_ref[...] = jnp.concatenate(cols, axis=-1)               # one dense store


def cosine_similarities(ana, gold, cands, *, max_tile_b=512,
                        vmem_budget_bytes=24 * 1024 * 1024):
    """ana: [B, D], gold: [B, D], cands: [B, C, D] (float32).

    Returns (gold_cos [B, 1], cand_cos [B, C]) float32.
    """
    B, D = ana.shape
    _, C, _ = cands.shape
    C1 = C + 1
    L = max(128, _round_up(C1, 128))          # lane-dense output width

    ana = ana.astype(jnp.float32)
    gold = gold.astype(jnp.float32)
    cands2d = cands.astype(jnp.float32).reshape(B, C * D)   # free (contiguous)

    # Pick the largest batch tile that fits the (double-buffered) VMEM budget.
    bytes_per_row = (C * D + 2 * D + L) * 4
    vmem_rows = max(8, (vmem_budget_bytes // (2 * bytes_per_row)) // 8 * 8)
    tile_b = min(max_tile_b, vmem_rows, _round_up(B, 8))
    tile_b = max(8, tile_b // 8 * 8)

    Bp = _round_up(B, tile_b)
    if Bp != B:
        pad = Bp - B
        ana = jnp.pad(ana, ((0, pad), (0, 0)))
        gold = jnp.pad(gold, ((0, pad), (0, 0)))
        cands2d = jnp.pad(cands2d, ((0, pad), (0, 0)))

    grid = (Bp // tile_b,)
    out = pl.pallas_call(
        _cosine_kernel,
        out_shape=jax.ShapeDtypeStruct((Bp, L), jnp.float32),
        grid_spec=pltpu.PrefetchScalarGridSpec(
            num_scalar_prefetch=0,
            grid=grid,
            in_specs=[
                pl.BlockSpec((tile_b, D), lambda i: (i, 0)),
                pl.BlockSpec((tile_b, D), lambda i: (i, 0)),
                pl.BlockSpec((tile_b, C * D), lambda i: (i, 0)),
            ],
            out_specs=pl.BlockSpec((tile_b, L), lambda i: (i, 0)),
        ),
        compiler_params=pltpu.CompilerParams(
            dimension_semantics=("parallel",),   # megacore-shardable on v7x
            vmem_limit_bytes=48 * 1024 * 1024,
        ),
    )(ana, gold, cands2d)

    gold_cos = out[:B, 0:1]
    cand_cos = out[:B, 1:C1]
    return gold_cos, cand_cos


def model_forward(ana, gold, cands, labels):
    """Numeric equivalent of Model.forward's return value.

    Returns (all_batch_ana, all_batch_correct, gold_cos, cand_cos).
    """
    gold_cos, cand_cos = cosine_similarities(ana, gold, cands)
    # `candidates_cosines.index(max(...))` -> first argmax, same as jnp.argmax
    max_idx = jnp.argmax(cand_cos, axis=-1)                       # [B]
    chosen = jnp.take_along_axis(labels, max_idx[:, None], axis=1)[:, 0]
    all_batch_correct = jnp.sum(chosen == 1).astype(jnp.int32)
    all_batch_ana = jnp.int32(ana.shape[0])
    return all_batch_ana, all_batch_correct, gold_cos, cand_cos


# TODO(synk): SentenceTransformer('whaleloops/phrase-bert') encoding, string
# handling, file logging and running-average statistics have no Pallas
# equivalent; embeddings are synthesized deterministically instead.

if __name__ == "__main__":
    key = jax.random.PRNGKey(0)
    B, C, D = 16, 8, 128  # anaphors per batch, candidates per anaphor, emb dim
    k1, k2, k3, k4 = jax.random.split(key, 4)
    ana = jax.random.normal(k1, (B, D), dtype=jnp.float32)
    gold = jax.random.normal(k2, (B, D), dtype=jnp.float32)
    cands = jax.random.normal(k3, (B, C, D), dtype=jnp.float32)
    labels = jax.random.bernoulli(k4, p=0.3, shape=(B, C)).astype(jnp.int32)

    all_ana, correct, gold_cos, cand_cos = model_forward(ana, gold, cands, labels)
    jax.block_until_ready((correct, gold_cos, cand_cos))

    # sanity check against plain-JAX reference of nn.CosineSimilarity
    def ref_cos(x, y):
        nx = jnp.linalg.norm(x, axis=-1)
        ny = jnp.linalg.norm(y, axis=-1)
        return jnp.sum(x * y, axis=-1) / jnp.maximum(nx * ny, EPS)

    ref_gold = ref_cos(ana, gold)[:, None]
    ref_cand = ref_cos(ana[:, None, :], cands)
    # slightly relaxed tolerance: EUP approximate reciprocal (~2^-12 rel err)
    assert jnp.allclose(gold_cos, ref_gold, atol=2e-3, rtol=2e-3)
    assert jnp.allclose(cand_cos, ref_cand, atol=2e-3, rtol=2e-3)
    assert int(all_ana) == B

    print("KERNEL_OK")
</pallas_src>

<mosaic_0001>
module attributes {stable_mosaic.version = 11 : i64} {
  func.func @_cosine_kernel(%arg0: i32, %arg1: memref<16x128xf32, #tpu.memory_space<vmem>>, %arg2: memref<16x128xf32, #tpu.memory_space<vmem>>, %arg3: memref<16x1024xf32, #tpu.memory_space<vmem>>, %arg4: memref<16x128xf32, #tpu.memory_space<vmem>>) attributes {dimension_semantics = [#tpu.dimension_semantics<parallel>], iteration_bounds = array<i64: 1>, scalar_prefetch = 0 : i64, scratch_operands = 0 : i64, tpu.core_type = #tpu.core_type<tc>, window_params = [{transform_indices = @transform_0, window_bounds = array<i64: 16, 128>}, {transform_indices = @transform_1, window_bounds = array<i64: 16, 128>}, {transform_indices = @transform_2, window_bounds = array<i64: 16, 1024>}, {transform_indices = @transform_3, window_bounds = array<i64: 16, 128>}]} {
    %c0 = arith.constant 0 : index
    %c0_0 = arith.constant 0 : index
    %0 = vector.load %arg1[%c0, %c0_0] : memref<16x128xf32, #tpu.memory_space<vmem>>, vector<16x128xf32>
    %1 = arith.mulf %0, %0 : vector<16x128xf32>
    %cst = arith.constant dense<0.000000e+00> : vector<16xf32>
    %2 = vector.multi_reduction <add>, %1, %cst [1] : vector<16x128xf32> to vector<16xf32>
    %3 = vector.shape_cast %2 : vector<16xf32> to vector<16x1xf32>
    %c0_1 = arith.constant 0 : index
    %c0_2 = arith.constant 0 : index
    %4 = vector.load %arg2[%c0_1, %c0_2] : memref<16x128xf32, #tpu.memory_space<vmem>>, vector<16x128xf32>
    %5 = arith.mulf %0, %4 : vector<16x128xf32>
    %cst_3 = arith.constant dense<0.000000e+00> : vector<16xf32>
    %6 = vector.multi_reduction <add>, %5, %cst_3 [1] : vector<16x128xf32> to vector<16xf32>
    %7 = vector.shape_cast %6 : vector<16xf32> to vector<16x1xf32>
    %8 = arith.mulf %4, %4 : vector<16x128xf32>
    %cst_4 = arith.constant dense<0.000000e+00> : vector<16xf32>
    %9 = vector.multi_reduction <add>, %8, %cst_4 [1] : vector<16x128xf32> to vector<16xf32>
    %10 = vector.shape_cast %9 : vector<16xf32> to vector<16x1xf32>
    %11 = arith.mulf %3, %10 : vector<16x1xf32>
    %12 = math.sqrt %11 : vector<16x1xf32>
    %cst_5 = arith.constant 9.99999997E-7 : f32
    %13 = vector.broadcast %cst_5 : f32 to vector<16x1xf32>
    %14 = arith.maximumf %12, %13 : vector<16x1xf32>
    %15 = tpu.reciprocal %14 {approx = true} : vector<16x1xf32> -> vector<16x1xf32>
    %16 = arith.mulf %7, %15 : vector<16x1xf32>
    %c0_6 = arith.constant 0 : index
    %c0_7 = arith.constant 0 : index
    %17 = vector.load %arg3[%c0_6, %c0_7] : memref<16x1024xf32, #tpu.memory_space<vmem>>, vector<16x128xf32>
    %18 = arith.mulf %0, %17 : vector<16x128xf32>
    %cst_8 = arith.constant dense<0.000000e+00> : vector<16xf32>
    %19 = vector.multi_reduction <add>, %18, %cst_8 [1] : vector<16x128xf32> to vector<16xf32>
    %20 = vector.shape_cast %19 : vector<16xf32> to vector<16x1xf32>
    %21 = arith.mulf %17, %17 : vector<16x128xf32>
    %cst_9 = arith.constant dense<0.000000e+00> : vector<16xf32>
    %22 = vector.multi_reduction <add>, %21, %cst_9 [1] : vector<16x128xf32> to vector<16xf32>
    %23 = vector.shape_cast %22 : vector<16xf32> to vector<16x1xf32>
    %24 = arith.mulf %3, %23 : vector<16x1xf32>
    %25 = math.sqrt %24 : vector<16x1xf32>
    %cst_10 = arith.constant 9.99999997E-7 : f32
    %26 = vector.broadcast %cst_10 : f32 to vector<16x1xf32>
    %27 = arith.maximumf %25, %26 : vector<16x1xf32>
    %28 = tpu.reciprocal %27 {approx = true} : vector<16x1xf32> -> vector<16x1xf32>
    %29 = arith.mulf %20, %28 : vector<16x1xf32>
    %c0_11 = arith.constant 0 : index
    %c128 = arith.constant 128 : index
    %30 = vector.load %arg3[%c0_11, %c128] : memref<16x1024xf32, #tpu.memory_space<vmem>>, vector<16x128xf32>
    %31 = arith.mulf %0, %30 : vector<16x128xf32>
    %cst_12 = arith.constant dense<0.000000e+00> : vector<16xf32>
    %32 = vector.multi_reduction <add>, %31, %cst_12 [1] : vector<16x128xf32> to vector<16xf32>
    %33 = vector.shape_cast %32 : vector<16xf32> to vector<16x1xf32>
    %34 = arith.mulf %30, %30 : vector<16x128xf32>
    %cst_13 = arith.constant dense<0.000000e+00> : vector<16xf32>
    %35 = vector.multi_reduction <add>, %34, %cst_13 [1] : vector<16x128xf32> to vector<16xf32>
    %36 = vector.shape_cast %35 : vector<16xf32> to vector<16x1xf32>
    %37 = arith.mulf %3, %36 : vector<16x1xf32>
    %38 = math.sqrt %37 : vector<16x1xf32>
    %cst_14 = arith.constant 9.99999997E-7 : f32
    %39 = vector.broadcast %cst_14 : f32 to vector<16x1xf32>
    %40 = arith.maximumf %38, %39 : vector<16x1xf32>
    %41 = tpu.reciprocal %40 {approx = true} : vector<16x1xf32> -> vector<16x1xf32>
    %42 = arith.mulf %33, %41 : vector<16x1xf32>
    %c0_15 = arith.constant 0 : index
    %c256 = arith.constant 256 : index
    %43 = vector.load %arg3[%c0_15, %c256] : memref<16x1024xf32, #tpu.memory_space<vmem>>, vector<16x128xf32>
    %44 = arith.mulf %0, %43 : vector<16x128xf32>
    %cst_16 = arith.constant dense<0.000000e+00> : vector<16xf32>
    %45 = vector.multi_reduction <add>, %44, %cst_16 [1] : vector<16x128xf32> to vector<16xf32>
    %46 = vector.shape_cast %45 : vector<16xf32> to vector<16x1xf32>
    %47 = arith.mulf %43, %43 : vector<16x128xf32>
    %cst_17 = arith.constant dense<0.000000e+00> : vector<16xf32>
    %48 = vector.multi_reduction <add>, %47, %cst_17 [1] : vector<16x128xf32> to vector<16xf32>
    %49 = vector.shape_cast %48 : vector<16xf32> to vector<16x1xf32>
    %50 = arith.mulf %3, %49 : vector<16x1xf32>
    %51 = math.sqrt %50 : vector<16x1xf32>
    %cst_18 = arith.constant 9.99999997E-7 : f32
    %52 = vector.broadcast %cst_18 : f32 to vector<16x1xf32>
    %53 = arith.maximumf %51, %52 : vector<16x1xf32>
    %54 = tpu.reciprocal %53 {approx = true} : vector<16x1xf32> -> vector<16x1xf32>
    %55 = arith.mulf %46, %54 : vector<16x1xf32>
    %c0_19 = arith.constant 0 : index
    %c384 = arith.constant 384 : index
    %56 = vector.load %arg3[%c0_19, %c384] : memref<16x1024xf32, #tpu.memory_space<vmem>>, vector<16x128xf32>
    %57 = arith.mulf %0, %56 : vector<16x128xf32>
    %cst_20 = arith.constant dense<0.000000e+00> : vector<16xf32>
    %58 = vector.multi_reduction <add>, %57, %cst_20 [1] : vector<16x128xf32> to vector<16xf32>
    %59 = vector.shape_cast %58 : vector<16xf32> to vector<16x1xf32>
    %60 = arith.mulf %56, %56 : vector<16x128xf32>
    %cst_21 = arith.constant dense<0.000000e+00> : vector<16xf32>
    %61 = vector.multi_reduction <add>, %60, %cst_21 [1] : vector<16x128xf32> to vector<16xf32>
    %62 = vector.shape_cast %61 : vector<16xf32> to vector<16x1xf32>
    %63 = arith.mulf %3, %62 : vector<16x1xf32>
    %64 = math.sqrt %63 : vector<16x1xf32>
    %cst_22 = arith.constant 9.99999997E-7 : f32
    %65 = vector.broadcast %cst_22 : f32 to vector<16x1xf32>
    %66 = arith.maximumf %64, %65 : vector<16x1xf32>
    %67 = tpu.reciprocal %66 {approx = true} : vector<16x1xf32> -> vector<16x1xf32>
    %68 = arith.mulf %59, %67 : vector<16x1xf32>
    %c0_23 = arith.constant 0 : index
    %c512 = arith.constant 512 : index
    %69 = vector.load %arg3[%c0_23, %c512] : memref<16x1024xf32, #tpu.memory_space<vmem>>, vector<16x128xf32>
    %70 = arith.mulf %0, %69 : vector<16x128xf32>
    %cst_24 = arith.constant dense<0.000000e+00> : vector<16xf32>
    %71 = vector.multi_reduction <add>, %70, %cst_24 [1] : vector<16x128xf32> to vector<16xf32>
    %72 = vector.shape_cast %71 : vector<16xf32> to vector<16x1xf32>
    %73 = arith.mulf %69, %69 : vector<16x128xf32>
    %cst_25 = arith.constant dense<0.000000e+00> : vector<16xf32>
    %74 = vector.multi_reduction <add>, %73, %cst_25 [1] : vector<16x128xf32> to vector<16xf32>
    %75 = vector.shape_cast %74 : vector<16xf32> to vector<16x1xf32>
    %76 = arith.mulf %3, %75 : vector<16x1xf32>
    %77 = math.sqrt %76 : vector<16x1xf32>
    %cst_26 = arith.constant 9.99999997E-7 : f32
    %78 = vector.broadcast %cst_26 : f32 to vector<16x1xf32>
    %79 = arith.maximumf %77, %78 : vector<16x1xf32>
    %80 = tpu.reciprocal %79 {approx = true} : vector<16x1xf32> -> vector<16x1xf32>
    %81 = arith.mulf %72, %80 : vector<16x1xf32>
    %c0_27 = arith.constant 0 : index
    %c640 = arith.constant 640 : index
    %82 = vector.load %arg3[%c0_27, %c640] : memref<16x1024xf32, #tpu.memory_space<vmem>>, vector<16x128xf32>
    %83 = arith.mulf %0, %82 : vector<16x128xf32>
    %cst_28 = arith.constant dense<0.000000e+00> : vector<16xf32>
    %84 = vector.multi_reduction <add>, %83, %cst_28 [1] : vector<16x128xf32> to vector<16xf32>
    %85 = vector.shape_cast %84 : vector<16xf32> to vector<16x1xf32>
    %86 = arith.mulf %82, %82 : vector<16x128xf32>
    %cst_29 = arith.constant dense<0.000000e+00> : vector<16xf32>
    %87 = vector.multi_reduction <add>, %86, %cst_29 [1] : vector<16x128xf32> to vector<16xf32>
    %88 = vector.shape_cast %87 : vector<16xf32> to vector<16x1xf32>
    %89 = arith.mulf %3, %88 : vector<16x1xf32>
    %90 = math.sqrt %89 : vector<16x1xf32>
    %cst_30 = arith.constant 9.99999997E-7 : f32
    %91 = vector.broadcast %cst_30 : f32 to vector<16x1xf32>
    %92 = arith.maximumf %90, %91 : vector<16x1xf32>
    %93 = tpu.reciprocal %92 {approx = true} : vector<16x1xf32> -> vector<16x1xf32>
    %94 = arith.mulf %85, %93 : vector<16x1xf32>
    %c0_31 = arith.constant 0 : index
    %c768 = arith.constant 768 : index
    %95 = vector.load %arg3[%c0_31, %c768] : memref<16x1024xf32, #tpu.memory_space<vmem>>, vector<16x128xf32>
    %96 = arith.mulf %0, %95 : vector<16x128xf32>
    %cst_32 = arith.constant dense<0.000000e+00> : vector<16xf32>
    %97 = vector.multi_reduction <add>, %96, %cst_32 [1] : vector<16x128xf32> to vector<16xf32>
    %98 = vector.shape_cast %97 : vector<16xf32> to vector<16x1xf32>
    %99 = arith.mulf %95, %95 : vector<16x128xf32>
    %cst_33 = arith.constant dense<0.000000e+00> : vector<16xf32>
    %100 = vector.multi_reduction <add>, %99, %cst_33 [1] : vector<16x128xf32> to vector<16xf32>
    %101 = vector.shape_cast %100 : vector<16xf32> to vector<16x1xf32>
    %102 = arith.mulf %3, %101 : vector<16x1xf32>
    %103 = math.sqrt %102 : vector<16x1xf32>
    %cst_34 = arith.constant 9.99999997E-7 : f32
    %104 = vector.broadcast %cst_34 : f32 to vector<16x1xf32>
    %105 = arith.maximumf %103, %104 : vector<16x1xf32>
    %106 = tpu.reciprocal %105 {approx = true} : vector<16x1xf32> -> vector<16x1xf32>
    %107 = arith.mulf %98, %106 : vector<16x1xf32>
    %c0_35 = arith.constant 0 : index
    %c896 = arith.constant 896 : index
    %108 = vector.load %arg3[%c0_35, %c896] : memref<16x1024xf32, #tpu.memory_space<vmem>>, vector<16x128xf32>
    %109 = arith.mulf %0, %108 : vector<16x128xf32>
    %cst_36 = arith.constant dense<0.000000e+00> : vector<16xf32>
    %110 = vector.multi_reduction <add>, %109, %cst_36 [1] : vector<16x128xf32> to vector<16xf32>
    %111 = vector.shape_cast %110 : vector<16xf32> to vector<16x1xf32>
    %112 = arith.mulf %108, %108 : vector<16x128xf32>
    %cst_37 = arith.constant dense<0.000000e+00> : vector<16xf32>
    %113 = vector.multi_reduction <add>, %112, %cst_37 [1] : vector<16x128xf32> to vector<16xf32>
    %114 = vector.shape_cast %113 : vector<16xf32> to vector<16x1xf32>
    %115 = arith.mulf %3, %114 : vector<16x1xf32>
    %116 = math.sqrt %115 : vector<16x1xf32>
    %cst_38 = arith.constant 9.99999997E-7 : f32
    %117 = vector.broadcast %cst_38 : f32 to vector<16x1xf32>
    %118 = arith.maximumf %116, %117 : vector<16x1xf32>
    %119 = tpu.reciprocal %118 {approx = true} : vector<16x1xf32> -> vector<16x1xf32>
    %120 = arith.mulf %111, %119 : vector<16x1xf32>
    %cst_39 = arith.constant 0.000000e+00 : f32
    %121 = vector.broadcast %cst_39 : f32 to vector<16x119xf32>
    %122 = tpu.concatenate %16, %29, %42, %55, %68, %81, %94, %107, %120, %121 in 1 : vector<16x1xf32>, vector<16x1xf32>, vector<16x1xf32>, vector<16x1xf32>, vector<16x1xf32>, vector<16x1xf32>, vector<16x1xf32>, vector<16x1xf32>, vector<16x1xf32>, vector<16x119xf32> -> vector<16x128xf32>
    %c0_40 = arith.constant 0 : index
    %c0_41 = arith.constant 0 : index
    %123 = vector.load %arg4[%c0_40, %c0_41] : memref<16x128xf32, #tpu.memory_space<vmem>>, vector<16x128xf32>
    tpu.vector_store %arg4[%c0_40, %c0_41], %122 {strides = array<i32>} : memref<16x128xf32, #tpu.memory_space<vmem>>, vector<16x128xf32>,
    return
  }
  func.func @transform_0(%arg0: i32) -> (i32, i32) {
    %c0_i32 = arith.constant 0 : i32
    %c0_i32_0 = arith.constant 0 : i32
    return %arg0, %c0_i32 : i32, i32
  }
  func.func @transform_1(%arg0: i32) -> (i32, i32) {
    %c0_i32 = arith.constant 0 : i32
    %c0_i32_0 = arith.constant 0 : i32
    return %arg0, %c0_i32 : i32, i32
  }
  func.func @transform_2(%arg0: i32) -> (i32, i32) {
    %c0_i32 = arith.constant 0 : i32
    %c0_i32_0 = arith.constant 0 : i32
    return %arg0, %c0_i32 : i32, i32
  }
  func.func @transform_3(%arg0: i32) -> (i32, i32) {
    %c0_i32 = arith.constant 0 : i32
    %c0_i32_0 = arith.constant 0 : i32
    return %arg0, %c0_i32 : i32, i32
  }
}

</mosaic_0001>

<llo_original>
// kernel: tpu_custom_call.1
$region0: #{tpu_custom_call.1}
  #allocation0 [shape = 'u32[]', space=smem, size = 0x4, offset = 0x4, fixed_abs, tag = 'smem constant byte address 0x4 - core index']
  #allocation1 [shape = 'u32[144,128]{1,0:T(1,128)}', space=vmem, size = 0x12000, scoped, tag = 'internal scratch']
  %s0 = inlined_call_operand.hbm [shape: f32[16,128], index: 0, kind: input, shape index: {}]
  %s1 = inlined_call_operand.hbm [shape: f32[16,128], index: 1, kind: input, shape index: {}]
  %s2 = inlined_call_operand.hbm [shape: f32[16,1024], index: 2, kind: input, shape index: {}]
  %s3 = inlined_call_operand.hbm [shape: f32[16,128], index: 3, kind: output, shape index: {}]
  %s4 = sld [smem:[#allocation0]]
  $region34: #{tpu_custom_call.1} parent=0
    _
  %s6 = ssub.s32 1, %s4
  %s7 = scalar_select 0, %s6, %s4
  $region1: #{tpu_custom_call.1} parent=0
    #allocation2 [shape = 'u8[8192]{0}', space=vmem, size = 0x2000, scoped, tag = 'input window, operand 0, single buffered']
    #allocation3 [shape = 's32[1]{0}', space=sflag, size = 0x4, scoped, tag = 'scoped memory for tpu_custom_call.1']
    #allocation4 [shape = 's32[1]{0}', space=sflag, size = 0x4, scoped, tag = 'scoped memory for tpu_custom_call.1']
    #allocation5 [shape = 'u8[8192]{0}', space=vmem, size = 0x2000, scoped, tag = 'input window, operand 1, single buffered']
    #allocation6 [shape = 's32[1]{0}', space=sflag, size = 0x4, scoped, tag = 'scoped memory for tpu_custom_call.1']
    #allocation7 [shape = 'u8[65536]{0}', space=vmem, size = 0x10000, scoped, tag = 'input window, operand 2, single buffered']
    #allocation8 [shape = 'u8[8192]{0}', space=vmem, size = 0x2000, scoped, tag = 'output window, operand 0, single buffered']
    %8 = vsyncpa [#allocation3], 0
    %9 = vsyncpa [#allocation6], 0
    %10 = vsyncpa [#allocation4], 0
    // Predicated region
    $region2: #{tpu_custom_call.1} parent=1 // pred_check
      _
    $region3: #{tpu_custom_call.1} parent=1 // pred_check_branch
      %12 = sbr.rel (0) target = $region5
    $region4: #{tpu_custom_call.1} parent=1 // pred_region
      %s14 = ssub.s32 256, 256
      %15 = vsyncadd [#allocation3], %s14
      %s16 = sshll.u32 [#allocation2], 4
      %s17 = int_to_ptr.vmem [resolvable:$true] %s16
      %22 = dma.hbm_to_vmem [thread:$0]  %s0, 256, %s17, [#allocation3], 128, 128, 8
    $region5: #{tpu_custom_call.1} parent=1 // pred_fallthru
      _
    // Predicated region
    $region6: #{tpu_custom_call.1} parent=1 // pred_check
      _
    $region7: #{tpu_custom_call.1} parent=1 // pred_check_branch
      %24 = sbr.rel (0) target = $region9
    $region8: #{tpu_custom_call.1} parent=1 // pred_region
      %s26 = ssub.s32 256, 256
      %27 = vsyncadd [#allocation6], %s26
      %s28 = sshll.u32 [#allocation5], 4
      %s29 = int_to_ptr.vmem [resolvable:$true] %s28
      %34 = dma.hbm_to_vmem [thread:$0]  %s1, 256, %s29, [#allocation6], 128, 128, 8
    $region9: #{tpu_custom_call.1} parent=1 // pred_fallthru
      _
    // Predicated region
    $region10: #{tpu_custom_call.1} parent=1 // pred_check
      _
    $region11: #{tpu_custom_call.1} parent=1 // pred_check_branch
      %36 = sbr.rel (0) target = $region13
    $region12: #{tpu_custom_call.1} parent=1 // pred_region
      %s38 = ssub.s32 2048, 2048
      %39 = vsyncadd [#allocation6], %s38
      %s40 = sshll.u32 [#allocation7], 4
      %s41 = int_to_ptr.vmem [resolvable:$true] %s40
      %46 = dma.hbm_to_vmem [thread:$0]  %s2, 2048, %s41, [#allocation6], 1024, 1024, 64
    $region13: #{tpu_custom_call.1} parent=1 // pred_fallthru
      _
    // Predicated region
    $region14: #{tpu_custom_call.1} parent=1 // pred_check
      _
    $region15: #{tpu_custom_call.1} parent=1 // pred_check_branch
      %48 = sbr.rel (0) target = $region17
    $region16: #{tpu_custom_call.1} parent=1 // pred_region
      %49 = dma.done [#allocation3], 256
    $region17: #{tpu_custom_call.1} parent=1 // pred_fallthru
      _
    // Predicated region
    $region18: #{tpu_custom_call.1} parent=1 // pred_check
      _
    $region19: #{tpu_custom_call.1} parent=1 // pred_check_branch
      %51 = sbr.rel (0) target = $region21
    $region20: #{tpu_custom_call.1} parent=1 // pred_region
      %52 = dma.done [#allocation6], 256
    $region21: #{tpu_custom_call.1} parent=1 // pred_fallthru
      _
    // Predicated region
    $region22: #{tpu_custom_call.1} parent=1 // pred_check
      _
    $region23: #{tpu_custom_call.1} parent=1 // pred_check_branch
      %54 = sbr.rel (0) target = $region25
    $region24: #{tpu_custom_call.1} parent=1 // pred_region
      %55 = dma.done [#allocation6], 2048
    $region25: #{tpu_custom_call.1} parent=1 // pred_fallthru
      _
    %v56 = vld [vmem:[#allocation2] sm:$0xff]
    %v57 = vld [vmem:[#allocation2 + $0x8] sm:$0xff]
    %v58 = vmul.f32 %v56, %v56
    %v59 = vmul.f32 %v57, %v57
    %60 = vadd.xlane.f32.xlu0 %v58
    %v61 = vpop.xlane.xlu0 %60
    %62 = vadd.xlane.f32.xlu0 %v59
    %v63 = vpop.xlane.xlu0 %62
    %v64 = vld [vmem:[#allocation5] sm:$0xff]
    %v65 = vld [vmem:[#allocation5 + $0x8] sm:$0xff]
    %v66 = vmul.f32 %v56, %v64
    %v67 = vmul.f32 %v57, %v65
    %68 = vadd.xlane.f32.xlu0 %v66
    %v69 = vpop.xlane.xlu0 %68
    %70 = vadd.xlane.f32.xlu0 %v67
    %v71 = vpop.xlane.xlu0 %70
    %v72 = vmul.f32 %v64, %v64
    %v73 = vmul.f32 %v65, %v65
    %74 = vadd.xlane.f32.xlu0 %v72
    %v75 = vpop.xlane.xlu0 %74
    %76 = vadd.xlane.f32.xlu0 %v73
    %v77 = vpop.xlane.xlu0 %76
    %v78 = vmul.f32 %v61, %v75
    %v79 = vmul.f32 %v63, %v77
    %v80 = vrsqrt.pop %v78
    %v81 = vmul.f32 %v78, %v80
    %vm82 = vcmp.eq.f32.partialorder %v78, inf
    %v83 = vsel %vm82, %v78, %v81
    %vm84 = vcmp.eq.f32.partialorder %v78, 0.0
    %v85 = vand.u32 %v78, 2147483648
    %v86 = vsel %vm84, %v85, %v83
    %v87 = vrsqrt.pop %v79
    %v88 = vmul.f32 %v79, %v87
    %vm89 = vcmp.eq.f32.partialorder %v79, inf
    %v90 = vsel %vm89, %v79, %v88
    %vm91 = vcmp.eq.f32.partialorder %v79, 0.0
    %v92 = vand.u32 %v79, 2147483648
    %v93 = vsel %vm91, %v92, %v90
    %v94 = vmax.f32 %v86, 1e-06
    %v95 = vmax.f32 %v93, 1e-06
    %v96 = vrcp.pop %v94
    %v97 = vrcp.pop %v95
    %v98 = vmul.f32 %v69, %v96
    %v99 = vmul.f32 %v71, %v97
    %v100 = vld [vmem:[#allocation7] sm:$0xff]
    %v101 = vld [vmem:[#allocation7 + $0x40] sm:$0xff]
    %v102 = vmul.f32 %v56, %v100
    %v103 = vmul.f32 %v57, %v101
    %104 = vadd.xlane.f32.xlu0 %v102
    %v105 = vpop.xlane.xlu0 %104
    %106 = vadd.xlane.f32.xlu0 %v103
    %v107 = vpop.xlane.xlu0 %106
    %v108 = vmul.f32 %v100, %v100
    %v109 = vmul.f32 %v101, %v101
    %110 = vadd.xlane.f32.xlu0 %v108
    %v111 = vpop.xlane.xlu0 %110
    %112 = vadd.xlane.f32.xlu0 %v109
    %v113 = vpop.xlane.xlu0 %112
    %v114 = vmul.f32 %v61, %v111
    %v115 = vmul.f32 %v63, %v113
    %v116 = vrsqrt.pop %v114
    %v117 = vmul.f32 %v114, %v116
    %vm118 = vcmp.eq.f32.partialorder %v114, inf
    %v119 = vsel %vm118, %v114, %v117
    %vm120 = vcmp.eq.f32.partialorder %v114, 0.0
    %v121 = vand.u32 %v114, 2147483648
    %v122 = vsel %vm120, %v121, %v119
    %v123 = vrsqrt.pop %v115
    %v124 = vmul.f32 %v115, %v123
    %vm125 = vcmp.eq.f32.partialorder %v115, inf
    %v126 = vsel %vm125, %v115, %v124
    %vm127 = vcmp.eq.f32.partialorder %v115, 0.0
    %v128 = vand.u32 %v115, 2147483648
    %v129 = vsel %vm127, %v128, %v126
    %v130 = vmax.f32 %v122, 1e-06
    %v131 = vmax.f32 %v129, 1e-06
    %v132 = vrcp.pop %v130
    %v133 = vrcp.pop %v131
    %v134 = vmul.f32 %v105, %v132
    %v135 = vmul.f32 %v107, %v133
    %v136 = vld [vmem:[#allocation7 + $0x8] sm:$0xff]
    %v137 = vld [vmem:[#allocation7 + $0x48] sm:$0xff]
    %v138 = vmul.f32 %v56, %v136
    %v139 = vmul.f32 %v57, %v137
    %140 = vadd.xlane.f32.xlu0 %v138
    %v141 = vpop.xlane.xlu0 %140
    %142 = vadd.xlane.f32.xlu0 %v139
    %v143 = vpop.xlane.xlu0 %142
    %v144 = vmul.f32 %v136, %v136
    %v145 = vmul.f32 %v137, %v137
    %146 = vadd.xlane.f32.xlu0 %v144
    %v147 = vpop.xlane.xlu0 %146
    %148 = vadd.xlane.f32.xlu0 %v145
    %v149 = vpop.xlane.xlu0 %148
    %v150 = vmul.f32 %v61, %v147
    %v151 = vmul.f32 %v63, %v149
    %v152 = vrsqrt.pop %v150
    %v153 = vmul.f32 %v150, %v152
    %vm154 = vcmp.eq.f32.partialorder %v150, inf
    %v155 = vsel %vm154, %v150, %v153
    %vm156 = vcmp.eq.f32.partialorder %v150, 0.0
    %v157 = vand.u32 %v150, 2147483648
    %v158 = vsel %vm156, %v157, %v155
    %v159 = vrsqrt.pop %v151
    %v160 = vmul.f32 %v151, %v159
    %vm161 = vcmp.eq.f32.partialorder %v151, inf
    %v162 = vsel %vm161, %v151, %v160
    %vm163 = vcmp.eq.f32.partialorder %v151, 0.0
    %v164 = vand.u32 %v151, 2147483648
    %v165 = vsel %vm163, %v164, %v162
    %v166 = vmax.f32 %v158, 1e-06
    %v167 = vmax.f32 %v165, 1e-06
    %v168 = vrcp.pop %v166
    %v169 = vrcp.pop %v167
    %v170 = vmul.f32 %v141, %v168
    %v171 = vmul.f32 %v143, %v169
    %v172 = vld [vmem:[#allocation7 + $0x10] sm:$0xff]
    %v173 = vld [vmem:[#allocation7 + $0x50] sm:$0xff]
    %v174 = vmul.f32 %v56, %v172
    %v175 = vmul.f32 %v57, %v173
    %176 = vadd.xlane.f32.xlu0 %v174
    %v177 = vpop.xlane.xlu0 %176
    %178 = vadd.xlane.f32.xlu0 %v175
    %v179 = vpop.xlane.xlu0 %178
    %v180 = vmul.f32 %v172, %v172
    %v181 = vmul.f32 %v173, %v173
    %182 = vadd.xlane.f32.xlu0 %v180
    %v183 = vpop.xlane.xlu0 %182
    %184 = vadd.xlane.f32.xlu0 %v181
    %v185 = vpop.xlane.xlu0 %184
    %v186 = vmul.f32 %v61, %v183
    %v187 = vmul.f32 %v63, %v185
    %v188 = vrsqrt.pop %v186
    %v189 = vmul.f32 %v186, %v188
    %vm190 = vcmp.eq.f32.partialorder %v186, inf
    %v191 = vsel %vm190, %v186, %v189
    %vm192 = vcmp.eq.f32.partialorder %v186, 0.0
    %v193 = vand.u32 %v186, 2147483648
    %v194 = vsel %vm192, %v193, %v191
    %v195 = vrsqrt.pop %v187
    %v196 = vmul.f32 %v187, %v195
    %vm197 = vcmp.eq.f32.partialorder %v187, inf
    %v198 = vsel %vm197, %v187, %v196
    %vm199 = vcmp.eq.f32.partialorder %v187, 0.0
    %v200 = vand.u32 %v187, 2147483648
    %v201 = vsel %vm199, %v200, %v198
    %v202 = vmax.f32 %v194, 1e-06
    %v203 = vmax.f32 %v201, 1e-06
    %v204 = vrcp.pop %v202
    %v205 = vrcp.pop %v203
    %v206 = vmul.f32 %v177, %v204
    %v207 = vmul.f32 %v179, %v205
    %v208 = vld [vmem:[#allocation7 + $0x18] sm:$0xff]
    %v209 = vld [vmem:[#allocation7 + $0x58] sm:$0xff]
    %v210 = vmul.f32 %v56, %v208
    %v211 = vmul.f32 %v57, %v209
    %212 = vadd.xlane.f32.xlu0 %v210
    %v213 = vpop.xlane.xlu0 %212
    %214 = vadd.xlane.f32.xlu0 %v211
    %v215 = vpop.xlane.xlu0 %214
    %v216 = vmul.f32 %v208, %v208
    %v217 = vmul.f32 %v209, %v209
    %218 = vadd.xlane.f32.xlu0 %v216
    %v219 = vpop.xlane.xlu0 %218
    %220 = vadd.xlane.f32.xlu0 %v217
    %v221 = vpop.xlane.xlu0 %220
    %v222 = vmul.f32 %v61, %v219
    %v223 = vmul.f32 %v63, %v221
    %v224 = vrsqrt.pop %v222
    %v225 = vmul.f32 %v222, %v224
    %vm226 = vcmp.eq.f32.partialorder %v222, inf
    %v227 = vsel %vm226, %v222, %v225
    %vm228 = vcmp.eq.f32.partialorder %v222, 0.0
    %v229 = vand.u32 %v222, 2147483648
    %v230 = vsel %vm228, %v229, %v227
    %v231 = vrsqrt.pop %v223
    %v232 = vmul.f32 %v223, %v231
    %vm233 = vcmp.eq.f32.partialorder %v223, inf
    %v234 = vsel %vm233, %v223, %v232
    %vm235 = vcmp.eq.f32.partialorder %v223, 0.0
    %v236 = vand.u32 %v223, 2147483648
    %v237 = vsel %vm235, %v236, %v234
    %v238 = vmax.f32 %v230, 1e-06
    %v239 = vmax.f32 %v237, 1e-06
    %v240 = vrcp.pop %v238
    %v241 = vrcp.pop %v239
    %v242 = vmul.f32 %v213, %v240
    %v243 = vmul.f32 %v215, %v241
    %v244 = vld [vmem:[#allocation7 + $0x20] sm:$0xff]
    %v245 = vld [vmem:[#allocation7 + $0x60] sm:$0xff]
    %v246 = vmul.f32 %v56, %v244
    %v247 = vmul.f32 %v57, %v245
    %248 = vadd.xlane.f32.xlu0 %v246
    %v249 = vpop.xlane.xlu0 %248
    %250 = vadd.xlane.f32.xlu0 %v247
    %v251 = vpop.xlane.xlu0 %250
    %v252 = vmul.f32 %v244, %v244
    %v253 = vmul.f32 %v245, %v245
    %254 = vadd.xlane.f32.xlu0 %v252
    %v255 = vpop.xlane.xlu0 %254
    %256 = vadd.xlane.f32.xlu0 %v253
    %v257 = vpop.xlane.xlu0 %256
    %v258 = vmul.f32 %v61, %v255
    %v259 = vmul.f32 %v63, %v257
    %v260 = vrsqrt.pop %v258
    %v261 = vmul.f32 %v258, %v260
    %vm262 = vcmp.eq.f32.partialorder %v258, inf
    %v263 = vsel %vm262, %v258, %v261
    %vm264 = vcmp.eq.f32.partialorder %v258, 0.0
    %v265 = vand.u32 %v258, 2147483648
    %v266 = vsel %vm264, %v265, %v263
    %v267 = vrsqrt.pop %v259
    %v268 = vmul.f32 %v259, %v267
    %vm269 = vcmp.eq.f32.partialorder %v259, inf
    %v270 = vsel %vm269, %v259, %v268
    %vm271 = vcmp.eq.f32.partialorder %v259, 0.0
    %v272 = vand.u32 %v259, 2147483648
    %v273 = vsel %vm271, %v272, %v270
    %v274 = vmax.f32 %v266, 1e-06
    %v275 = vmax.f32 %v273, 1e-06
    %v276 = vrcp.pop %v274
    %v277 = vrcp.pop %v275
    %v278 = vmul.f32 %v249, %v276
    %v279 = vmul.f32 %v251, %v277
    %v280 = vld [vmem:[#allocation7 + $0x28] sm:$0xff]
    %v281 = vld [vmem:[#allocation7 + $0x68] sm:$0xff]
    %v282 = vmul.f32 %v56, %v280
    %v283 = vmul.f32 %v57, %v281
    %284 = vadd.xlane.f32.xlu0 %v282
    %v285 = vpop.xlane.xlu0 %284
    %286 = vadd.xlane.f32.xlu0 %v283
    %v287 = vpop.xlane.xlu0 %286
    %v288 = vmul.f32 %v280, %v280
    %v289 = vmul.f32 %v281, %v281
    %290 = vadd.xlane.f32.xlu0 %v288
    %v291 = vpop.xlane.xlu0 %290
    %292 = vadd.xlane.f32.xlu0 %v289
    %v293 = vpop.xlane.xlu0 %292
    %v294 = vmul.f32 %v61, %v291
    %v295 = vmul.f32 %v63, %v293
    %v296 = vrsqrt.pop %v294
    %v297 = vmul.f32 %v294, %v296
    %vm298 = vcmp.eq.f32.partialorder %v294, inf
    %v299 = vsel %vm298, %v294, %v297
    %vm300 = vcmp.eq.f32.partialorder %v294, 0.0
    %v301 = vand.u32 %v294, 2147483648
    %v302 = vsel %vm300, %v301, %v299
    %v303 = vrsqrt.pop %v295
    %v304 = vmul.f32 %v295, %v303
    %vm305 = vcmp.eq.f32.partialorder %v295, inf
    %v306 = vsel %vm305, %v295, %v304
    %vm307 = vcmp.eq.f32.partialorder %v295, 0.0
    %v308 = vand.u32 %v295, 2147483648
    %v309 = vsel %vm307, %v308, %v306
    %v310 = vmax.f32 %v302, 1e-06
    %v311 = vmax.f32 %v309, 1e-06
    %v312 = vrcp.pop %v310
    %v313 = vrcp.pop %v311
    %v314 = vmul.f32 %v285, %v312
    %v315 = vmul.f32 %v287, %v313
    %v316 = vld [vmem:[#allocation7 + $0x30] sm:$0xff]
    %v317 = vld [vmem:[#allocation7 + $0x70] sm:$0xff]
    %v318 = vmul.f32 %v56, %v316
    %v319 = vmul.f32 %v57, %v317
    %320 = vadd.xlane.f32.xlu0 %v318
    %v321 = vpop.xlane.xlu0 %320
    %322 = vadd.xlane.f32.xlu0 %v319
    %v323 = vpop.xlane.xlu0 %322
    %v324 = vmul.f32 %v316, %v316
    %v325 = vmul.f32 %v317, %v317
    %326 = vadd.xlane.f32.xlu0 %v324
    %v327 = vpop.xlane.xlu0 %326
    %328 = vadd.xlane.f32.xlu0 %v325
    %v329 = vpop.xlane.xlu0 %328
    %v330 = vmul.f32 %v61, %v327
    %v331 = vmul.f32 %v63, %v329
    %v332 = vrsqrt.pop %v330
    %v333 = vmul.f32 %v330, %v332
    %vm334 = vcmp.eq.f32.partialorder %v330, inf
    %v335 = vsel %vm334, %v330, %v333
    %vm336 = vcmp.eq.f32.partialorder %v330, 0.0
    %v337 = vand.u32 %v330, 2147483648
    %v338 = vsel %vm336, %v337, %v335
    %v339 = vrsqrt.pop %v331
    %v340 = vmul.f32 %v331, %v339
    %vm341 = vcmp.eq.f32.partialorder %v331, inf
    %v342 = vsel %vm341, %v331, %v340
    %vm343 = vcmp.eq.f32.partialorder %v331, 0.0
    %v344 = vand.u32 %v331, 2147483648
    %v345 = vsel %vm343, %v344, %v342
    %v346 = vmax.f32 %v338, 1e-06
    %v347 = vmax.f32 %v345, 1e-06
    %v348 = vrcp.pop %v346
    %v349 = vrcp.pop %v347
    %v350 = vmul.f32 %v321, %v348
    %v351 = vmul.f32 %v323, %v349
    %v352 = vld [vmem:[#allocation7 + $0x38] sm:$0xff]
    %v353 = vld [vmem:[#allocation7 + $0x78] sm:$0xff]
    %v354 = vmul.f32 %v56, %v352
    %v355 = vmul.f32 %v57, %v353
    %356 = vadd.xlane.f32.xlu0 %v354
    %v357 = vpop.xlane.xlu0 %356
    %358 = vadd.xlane.f32.xlu0 %v355
    %v359 = vpop.xlane.xlu0 %358
    %v360 = vmul.f32 %v352, %v352
    %v361 = vmul.f32 %v353, %v353
    %362 = vadd.xlane.f32.xlu0 %v360
    %v363 = vpop.xlane.xlu0 %362
    %364 = vadd.xlane.f32.xlu0 %v361
    %v365 = vpop.xlane.xlu0 %364
    %v366 = vmul.f32 %v61, %v363
    %v367 = vmul.f32 %v63, %v365
    %v368 = vrsqrt.pop %v366
    %v369 = vmul.f32 %v366, %v368
    %vm370 = vcmp.eq.f32.partialorder %v366, inf
    %v371 = vsel %vm370, %v366, %v369
    %vm372 = vcmp.eq.f32.partialorder %v366, 0.0
    %v373 = vand.u32 %v366, 2147483648
    %v374 = vsel %vm372, %v373, %v371
    %v375 = vrsqrt.pop %v367
    %v376 = vmul.f32 %v367, %v375
    %vm377 = vcmp.eq.f32.partialorder %v367, inf
    %v378 = vsel %vm377, %v367, %v376
    %vm379 = vcmp.eq.f32.partialorder %v367, 0.0
    %v380 = vand.u32 %v367, 2147483648
    %v381 = vsel %vm379, %v380, %v378
    %v382 = vmax.f32 %v374, 1e-06
    %v383 = vmax.f32 %v381, 1e-06
    %v384 = vrcp.pop %v382
    %v385 = vrcp.pop %v383
    %v386 = vmul.f32 %v357, %v384
    %v387 = vmul.f32 %v359, %v385
    %vm388 = vcmask 7168
    %v389 = vsel %vm388, %v98, %v134
    %v390 = vsel %vm388, %v99, %v135
    %vm391 = vcmask 15360
    %v392 = vsel %vm391, %v389, %v170
    %v393 = vsel %vm391, %v390, %v171
    %vm394 = vcmask 23552
    %v395 = vsel %vm394, %v392, %v206
    %v396 = vsel %vm394, %v393, %v207
    %vm397 = vcmask 31744
    %v398 = vsel %vm397, %v395, %v242
    %v399 = vsel %vm397, %v396, %v243
    %vm400 = vcmask 39936
    %v401 = vsel %vm400, %v398, %v278
    %v402 = vsel %vm400, %v399, %v279
    %vm403 = vcmask 48128
    %v404 = vsel %vm403, %v401, %v314
    %v405 = vsel %vm403, %v402, %v315
    %vm406 = vcmask 56320
    %v407 = vsel %vm406, %v404, %v350
    %v408 = vsel %vm406, %v405, %v351
    %vm409 = vcmask 64512
    %v410 = vsel %vm409, %v407, %v386
    %v411 = vsel %vm409, %v408, %v387
    %vm412 = vcmask 72704
    %v413 = vsel %vm412, %v410, 0.0
    %v414 = vsel %vm412, %v411, 0.0
    %415 = vst [vmem:[#allocation8] sm:$0xff] %v413
    %416 = vst [vmem:[#allocation8 + $0x8] sm:$0xff] %v414
    // Predicated region
    $region26: #{tpu_custom_call.1} parent=1 // pred_check
      _
    $region27: #{tpu_custom_call.1} parent=1 // pred_check_branch
      %418 = sbr.rel (0) target = $region29
    $region28: #{tpu_custom_call.1} parent=1 // pred_region
      %s420 = ssub.s32 256, 256
      %421 = vsyncadd [#allocation4], %s420
      %s422 = sshll.u32 [#allocation8], 4
      %s423 = int_to_ptr.vmem [resolvable:$true] %s422
      %428 = dma.vmem_to_hbm [thread:$0]  %s423, 256, %s3, [#allocation4], 128, 128, 8
    $region29: #{tpu_custom_call.1} parent=1 // pred_fallthru
      _
    // Predicated region
    $region30: #{tpu_custom_call.1} parent=1 // pred_check
      _
    $region31: #{tpu_custom_call.1} parent=1 // pred_check_branch
      %430 = sbr.rel (0) target = $region33
    $region32: #{tpu_custom_call.1} parent=1 // pred_region
      %431 = dma.done [#allocation4], 256
    $region33: #{tpu_custom_call.1} parent=1 // pred_fallthru
      _
    %432 = vsyncpa [#allocation3], 1
    %433 = vsyncpa [#allocation6], 1
    %434 = vsyncpa [#allocation4], 1

</llo_original>
